<compile_context>
chip_gen: v5e
topology: v5e:2x2
jax: 0.10.0
libtpu: 0.0.40
codegen_flags: <defaults>
</compile_context>

<pallas_src>
import math
from functools import partial

import jax
import jax.numpy as jnp
from jax.experimental import pallas as pl
from jax.experimental.pallas import tpu as pltpu


def _round_up(x, m):
    return ((x + m - 1) // m) * m


def _se_kernel(x_ref, w1_ref, b1_ref, w2_ref, b2_ref, o_ref, acc_ref, *,
               thw, acc_lw, tail_len, inv_hw):
    # Grid = (batch tiles ["parallel"], spatial chunks ["arbitrary" reduction]).
    # x_ref:  (TB, C, THW)   w1_ref: (C, HID)   b1_ref: (1, HID)
    # w2_ref: (HID, P)       b2_ref: (1, P)     o_ref: (TB, P)
    # acc_ref: (TB, C, ACC_LW) f32 running partial sum, ACC_LW in {1, 128}.
    s = pl.program_id(1)
    last = pl.num_programs(1) - 1

    @pl.when(s == 0)
    def _():
        acc_ref[...] = jnp.zeros_like(acc_ref)

    def accumulate(xv):
        # Collapse the chunk to one vreg width per (b, c) row with pure VALU
        # adds over 128-aligned static lane slices (no cross-lane movement).
        if thw % 128 == 0 and thw > 128:
            part = xv[:, :, 0:128]
            for g in range(1, thw // 128):
                part = part + xv[:, :, g * 128:(g + 1) * 128]
        else:
            part = xv
        if acc_lw == part.shape[-1]:
            acc_ref[...] += part            # cross-lane reduce deferred to epilogue
        else:
            acc_ref[...] += jnp.sum(part, axis=-1, keepdims=True)

    x = x_ref[...].astype(jnp.float32)

    if tail_len:  # hw % thw != 0: only the last chunk's OOB lanes need masking
        @pl.when(s != last)
        def _():
            accumulate(x)

        @pl.when(s == last)
        def _():
            lane = jax.lax.broadcasted_iota(jnp.int32, x.shape, 2)
            accumulate(jnp.where(lane < tail_len, x, 0.0))
    else:
        accumulate(x)

    @pl.when(s == last)
    def _():
        # Single cross-lane reduce; divide by the TRUE H*W -> global mean.
        y = jnp.sum(acc_ref[...], axis=-1) * inv_hw                 # (TB, C)
        h = jnp.dot(y, w1_ref[...],
                    preferred_element_type=jnp.float32) + b1_ref[...]
        h = jnp.maximum(h, 0.0)                                     # ReLU
        z = jnp.dot(h, w2_ref[...],
                    preferred_element_type=jnp.float32) + b2_ref[...]
        o_ref[...] = jax.nn.sigmoid(z)                              # Sigmoid gate


def se_layer(x, w1, b1, w2, b2, *, tb_target=64, thw_max=2048,
             tile_bytes_target=(2 << 20)):
    """x: (B, C, H, W) float32/bfloat16. Returns the gate (B, out_planes, 1, 1) f32."""
    b, c, h, w = x.shape
    hw = h * w
    hid = w1.shape[1]
    p = w2.shape[1]
    itemsize = jnp.dtype(x.dtype).itemsize

    # --- generation-aware VMEM clamp (v7x: 64 MiB physical; v5e/v6e: 128 MiB) ---
    try:
        vmem_cap = int(pltpu.get_tpu_info().vmem_capacity_bytes)
    except Exception:
        vmem_cap = 64 << 20
    vmem_clamp = min(vmem_cap // 2, 64 << 20)

    # --- spatial tiling: one full-width chunk when it fits, else multiples of 128
    #     with the ragged tail masked inside the kernel (no wrapper pad). ---
    if hw <= thw_max:
        thw = hw
    else:
        thw = thw_max  # multiple of 128
        while c * thw * itemsize > (4 << 20) and thw > 128:
            thw = max(128, ((thw // 2) // 128) * 128)

    # --- batch tiling: target ~tile_bytes_target of x per grid step;
    #     tb must equal b or be a multiple of 8 (output block constraint). ---
    row_bytes = max(1, c * thw * itemsize)
    tb = min(b, tb_target, max(1, tile_bytes_target // row_bytes))
    if tb < b:
        tb = max(8, (tb // 8) * 8)
        if tb >= b:
            tb = b
    # v7x megacore: keep >= 2 parallel batch tiles when the batch allows it.
    if b >= 16:
        tb = min(tb, max(8, ((b // 2) // 8) * 8))

    def _budget(tb_, thw_):
        x_tile = tb_ * c * thw_ * itemsize
        weights = 2 * (c * hid + hid + hid * p + p) * 4   # double-buffered even when constant-index
        lw = 128 if (thw_ % 128 == 0 and tb_ * c * 128 * 4 <= (2 << 20)) else 1
        scratch = tb_ * c * lw * 4
        out = 2 * tb_ * p * 4
        return 2 * x_tile + weights + scratch + out + (2 << 20)

    # Shrink tiles if the budget would blow the clamp (large C / out_planes).
    while _budget(tb, thw) > vmem_clamp:
        if tb > 8:
            tb = max(8, ((tb // 2) // 8) * 8)
        elif thw > 256 and thw % 256 == 0:
            thw //= 2
        else:
            break

    acc_lw = 128 if (thw % 128 == 0 and tb * c * 128 * 4 <= (2 << 20)) else 1
    vmem_limit = int(min(max(_budget(tb, thw), 8 << 20), vmem_clamp))

    n_b = pl.cdiv(b, tb)
    n_s = pl.cdiv(hw, thw)
    tail_len = hw % thw  # 0 => no in-kernel masking needed

    x_flat = x.reshape(b, c, hw)   # contiguous reshape, no copy of substance

    kernel = partial(_se_kernel, thw=thw, acc_lw=acc_lw, tail_len=tail_len,
                     inv_hw=1.0 / float(hw))

    out = pl.pallas_call(
        kernel,
        out_shape=jax.ShapeDtypeStruct((b, p), jnp.float32),
        grid=(n_b, n_s),
        in_specs=[
            pl.BlockSpec((tb, c, thw), lambda bi, si: (bi, 0, si)),
            pl.BlockSpec((c, hid), lambda bi, si: (0, 0)),   # resident weights
            pl.BlockSpec((1, hid), lambda bi, si: (0, 0)),
            pl.BlockSpec((hid, p), lambda bi, si: (0, 0)),
            pl.BlockSpec((1, p), lambda bi, si: (0, 0)),
        ],
        out_specs=pl.BlockSpec((tb, p), lambda bi, si: (bi, 0)),
        scratch_shapes=[pltpu.VMEM((tb, c, acc_lw), jnp.float32)],
        compiler_params=pltpu.CompilerParams(
            dimension_semantics=("parallel", "arbitrary"),
            vmem_limit_bytes=vmem_limit),
    )(x_flat, w1, b1, w2, b2)

    return out.reshape(b, p, 1, 1)


def init_se_params(key, in_planes, out_planes, reduction=16):
    """make_fc init: kaiming_uniform_(a=1) => bound = sqrt(3/fan_in); bias = 0.
    Weights returned pre-transposed (fan_in, fan_out) for y @ W."""
    hidden = out_planes // reduction
    k1, k2 = jax.random.split(key, 2)

    bound1 = math.sqrt(3.0 / in_planes)
    w1 = jax.random.uniform(k1, (in_planes, hidden), jnp.float32,
                            minval=-bound1, maxval=bound1)
    b1 = jnp.zeros((1, hidden), jnp.float32)

    bound2 = math.sqrt(3.0 / hidden)
    w2 = jax.random.uniform(k2, (hidden, out_planes), jnp.float32,
                            minval=-bound2, maxval=bound2)
    b2 = jnp.zeros((1, out_planes), jnp.float32)
    return w1, b1, w2, b2


def se_layer_ref(x, w1, b1, w2, b2):
    """Pure-JAX reference for correctness checking."""
    b = x.shape[0]
    y = jnp.mean(x.astype(jnp.float32), axis=(2, 3))
    h = jnp.maximum(y @ w1 + b1, 0.0)
    z = jax.nn.sigmoid(h @ w2 + b2)
    return z.reshape(b, w2.shape[1], 1, 1)


def _check(key, B, C, H, W, out_planes, reduction, dtype=jnp.float32,
           atol=1e-5, **kwargs):
    kx, kp = jax.random.split(key)
    x = jax.random.normal(kx, (B, C, H, W), jnp.float32).astype(dtype)
    w1, b1, w2, b2 = init_se_params(kp, C, out_planes, reduction)

    out = jax.block_until_ready(se_layer(x, w1, b1, w2, b2, **kwargs))
    ref = se_layer_ref(x, w1, b1, w2, b2)

    assert out.shape == (B, out_planes, 1, 1), out.shape
    err = float(jnp.max(jnp.abs(out - ref)))
    assert jnp.allclose(out, ref, atol=atol, rtol=1e-4), f"mismatch, max err {err}"


if __name__ == "__main__":
    key = jax.random.PRNGKey(0)
    k1, k2, k3 = jax.random.split(key, 3)

    # Small shape consistent with the module: single full-width spatial chunk
    # (hw=64, not a multiple of 128 -> direct-reduce accumulator path).
    _check(k1, B=2, C=16, H=8, W=8, out_planes=16, reduction=4)

    # Force the multi-chunk path with a ragged tail (hw=576, thw=256 -> 3 chunks,
    # 64-lane masked tail) and the deferred (TB,C,128) accumulator.
    _check(k2, B=2, C=16, H=24, W=24, out_planes=16, reduction=4, thw_max=256)

    # bf16 streaming of x (half the HBM bytes), f32 accumulation in-kernel.
    _check(k3, B=4, C=32, H=16, W=16, out_planes=32, reduction=4,
           dtype=jnp.bfloat16, atol=5e-3)

    print("KERNEL_OK")
</pallas_src>

<mosaic_0001>
module attributes {stable_mosaic.version = 11 : i64} {
  func.func @_se_kernel(%arg0: i32, %arg1: i32, %arg2: memref<2x16x64xf32, #tpu.memory_space<vmem>>, %arg3: memref<16x4xf32, #tpu.memory_space<vmem>>, %arg4: memref<1x4xf32, #tpu.memory_space<vmem>>, %arg5: memref<4x16xf32, #tpu.memory_space<vmem>>, %arg6: memref<1x16xf32, #tpu.memory_space<vmem>>, %arg7: memref<2x16xf32, #tpu.memory_space<vmem>>, %arg8: memref<2x16x1xf32, #tpu.memory_space<vmem>>) attributes {dimension_semantics = [#tpu.dimension_semantics<parallel>, #tpu.dimension_semantics<arbitrary>], iteration_bounds = array<i64: 1, 1>, scalar_prefetch = 0 : i64, scratch_operands = 1 : i64, tpu.core_type = #tpu.core_type<tc>, window_params = [{transform_indices = @transform_0, window_bounds = array<i64: 2, 16, 64>}, {pipeline_mode = #tpu.pipeline_mode<synchronous>, transform_indices = @transform_1, window_bounds = array<i64: 16, 4>}, {pipeline_mode = #tpu.pipeline_mode<synchronous>, transform_indices = @transform_2, window_bounds = array<i64: 1, 4>}, {pipeline_mode = #tpu.pipeline_mode<synchronous>, transform_indices = @transform_3, window_bounds = array<i64: 4, 16>}, {pipeline_mode = #tpu.pipeline_mode<synchronous>, transform_indices = @transform_4, window_bounds = array<i64: 1, 16>}, {transform_indices = @transform_5, window_bounds = array<i64: 2, 16>}]} {
    %c0_i32 = arith.constant 0 : i32
    %0 = arith.cmpi eq, %arg1, %c0_i32 : i32
    %1 = arith.extui %0 : i1 to i32
    %c0_i32_0 = arith.constant 0 : i32
    %2 = arith.cmpi ne, %1, %c0_i32_0 : i32
    scf.if %2 {
      %cst_11 = arith.constant 0.000000e+00 : f32
      %12 = vector.broadcast %cst_11 : f32 to vector<2x16x1xf32>
      %c0_12 = arith.constant 0 : index
      %c0_13 = arith.constant 0 : index
      %c0_14 = arith.constant 0 : index
      %13 = vector.load %arg8[%c0_12, %c0_13, %c0_14] : memref<2x16x1xf32, #tpu.memory_space<vmem>>, vector<2x16x1xf32>
      tpu.vector_store %arg8[%c0_12, %c0_13, %c0_14], %12 {strides = array<i32>} : memref<2x16x1xf32, #tpu.memory_space<vmem>>, vector<2x16x1xf32>,
    } else {
    }
    %c0 = arith.constant 0 : index
    %c0_1 = arith.constant 0 : index
    %c0_2 = arith.constant 0 : index
    %3 = vector.load %arg2[%c0, %c0_1, %c0_2] : memref<2x16x64xf32, #tpu.memory_space<vmem>>, vector<2x16x64xf32>
    %c0_3 = arith.constant 0 : index
    %c0_4 = arith.constant 0 : index
    %c0_5 = arith.constant 0 : index
    %4 = vector.load %arg8[%c0_3, %c0_4, %c0_5] : memref<2x16x1xf32, #tpu.memory_space<vmem>>, vector<2x16x1xf32>
    %cst = arith.constant dense<0.000000e+00> : vector<2x16xf32>
    %5 = vector.multi_reduction <add>, %3, %cst [2] : vector<2x16x64xf32> to vector<2x16xf32>
    %6 = vector.shape_cast %5 : vector<2x16xf32> to vector<2x16x1xf32>
    %7 = arith.addf %4, %6 : vector<2x16x1xf32>
    %c0_6 = arith.constant 0 : index
    %c0_7 = arith.constant 0 : index
    %c0_8 = arith.constant 0 : index
    %8 = vector.load %arg8[%c0_6, %c0_7, %c0_8] : memref<2x16x1xf32, #tpu.memory_space<vmem>>, vector<2x16x1xf32>
    tpu.vector_store %arg8[%c0_6, %c0_7, %c0_8], %7 {strides = array<i32>} : memref<2x16x1xf32, #tpu.memory_space<vmem>>, vector<2x16x1xf32>,
    %c0_i32_9 = arith.constant 0 : i32
    %9 = arith.cmpi eq, %arg1, %c0_i32_9 : i32
    %10 = arith.extui %9 : i1 to i32
    %c0_i32_10 = arith.constant 0 : i32
    %11 = arith.cmpi ne, %10, %c0_i32_10 : i32
    scf.if %11 {
      %c0_11 = arith.constant 0 : index
      %c0_12 = arith.constant 0 : index
      %c0_13 = arith.constant 0 : index
      %12 = vector.load %arg8[%c0_11, %c0_12, %c0_13] : memref<2x16x1xf32, #tpu.memory_space<vmem>>, vector<2x16x1xf32>
      %cst_14 = arith.constant dense<0.000000e+00> : vector<2x16xf32>
      %13 = vector.multi_reduction <add>, %12, %cst_14 [2] : vector<2x16x1xf32> to vector<2x16xf32>
      %cst_15 = arith.constant 1.562500e-02 : f32
      %14 = vector.broadcast %cst_15 : f32 to vector<2x16xf32>
      %15 = arith.mulf %13, %14 : vector<2x16xf32>
      %c0_16 = arith.constant 0 : index
      %c0_17 = arith.constant 0 : index
      %16 = vector.load %arg3[%c0_16, %c0_17] : memref<16x4xf32, #tpu.memory_space<vmem>>, vector<16x4xf32>
      %cst_18 = arith.constant dense<0.000000e+00> : vector<2x4xf32>
      %17 = tpu.matmul %15, %16, %cst_18 {dimension_numbers = #tpu.dot_dimension_numbers<[1], [0], [0], [1], [0, 0, 1, 1], [], []>} : vector<2x16xf32>, vector<16x4xf32>, vector<2x4xf32> -> vector<2x4xf32>
      %c0_19 = arith.constant 0 : index
      %c0_20 = arith.constant 0 : index
      %18 = vector.load %arg4[%c0_19, %c0_20] : memref<1x4xf32, #tpu.memory_space<vmem>>, vector<1x4xf32>
      %19 = vector.broadcast %18 : vector<1x4xf32> to vector<2x4xf32>
      %20 = arith.addf %17, %19 : vector<2x4xf32>
      %cst_21 = arith.constant 0.000000e+00 : f32
      %21 = vector.broadcast %cst_21 : f32 to vector<2x4xf32>
      %22 = arith.maximumf %20, %21 : vector<2x4xf32>
      %c0_22 = arith.constant 0 : index
      %c0_23 = arith.constant 0 : index
      %23 = vector.load %arg5[%c0_22, %c0_23] : memref<4x16xf32, #tpu.memory_space<vmem>>, vector<4x16xf32>
      %cst_24 = arith.constant dense<0.000000e+00> : vector<2x16xf32>
      %24 = tpu.matmul %22, %23, %cst_24 {dimension_numbers = #tpu.dot_dimension_numbers<[1], [0], [0], [1], [0, 0, 1, 1], [], []>} : vector<2x4xf32>, vector<4x16xf32>, vector<2x16xf32> -> vector<2x16xf32>
      %c0_25 = arith.constant 0 : index
      %c0_26 = arith.constant 0 : index
      %25 = vector.load %arg6[%c0_25, %c0_26] : memref<1x16xf32, #tpu.memory_space<vmem>>, vector<1x16xf32>
      %26 = vector.broadcast %25 : vector<1x16xf32> to vector<2x16xf32>
      %27 = arith.addf %24, %26 : vector<2x16xf32>
      %28 = arith.negf %27 : vector<2x16xf32>
      %29 = math.exp %28 : vector<2x16xf32>
      %cst_27 = arith.constant 1.000000e+00 : f32
      %30 = vector.broadcast %cst_27 : f32 to vector<2x16xf32>
      %31 = arith.addf %30, %29 : vector<2x16xf32>
      %32 = arith.divf %30, %31 : vector<2x16xf32>
      %c0_28 = arith.constant 0 : index
      %c0_29 = arith.constant 0 : index
      %33 = vector.load %arg7[%c0_28, %c0_29] : memref<2x16xf32, #tpu.memory_space<vmem>>, vector<2x16xf32>
      tpu.vector_store %arg7[%c0_28, %c0_29], %32 {strides = array<i32>} : memref<2x16xf32, #tpu.memory_space<vmem>>, vector<2x16xf32>,
    } else {
    }
    return
  }
  func.func @transform_0(%arg0: i32, %arg1: i32) -> (i32, i32, i32) {
    %c0_i32 = arith.constant 0 : i32
    %c0_i32_0 = arith.constant 0 : i32
    return %arg0, %c0_i32, %arg1 : i32, i32, i32
  }
  func.func @transform_1(%arg0: i32, %arg1: i32) -> (i32, i32) {
    %c0_i32 = arith.constant 0 : i32
    %c0_i32_0 = arith.constant 0 : i32
    %c0_i32_1 = arith.constant 0 : i32
    return %c0_i32, %c0_i32_0 : i32, i32
  }
  func.func @transform_2(%arg0: i32, %arg1: i32) -> (i32, i32) {
    %c0_i32 = arith.constant 0 : i32
    %c0_i32_0 = arith.constant 0 : i32
    %c0_i32_1 = arith.constant 0 : i32
    return %c0_i32, %c0_i32_0 : i32, i32
  }
  func.func @transform_3(%arg0: i32, %arg1: i32) -> (i32, i32) {
    %c0_i32 = arith.constant 0 : i32
    %c0_i32_0 = arith.constant 0 : i32
    %c0_i32_1 = arith.constant 0 : i32
    return %c0_i32, %c0_i32_0 : i32, i32
  }
  func.func @transform_4(%arg0: i32, %arg1: i32) -> (i32, i32) {
    %c0_i32 = arith.constant 0 : i32
    %c0_i32_0 = arith.constant 0 : i32
    %c0_i32_1 = arith.constant 0 : i32
    return %c0_i32, %c0_i32_0 : i32, i32
  }
  func.func @transform_5(%arg0: i32, %arg1: i32) -> (i32, i32) {
    %c0_i32 = arith.constant 0 : i32
    %c0_i32_0 = arith.constant 0 : i32
    return %arg0, %c0_i32 : i32, i32
  }
}

</mosaic_0001>

<llo_original>
// kernel: tpu_custom_call.1
$region0: #{tpu_custom_call.1}
  #allocation0 [shape = 'u32[]', space=smem, size = 0x4, offset = 0x4, fixed_abs, tag = 'smem constant byte address 0x4 - core index']
  #allocation1 [shape = 'u32[72,128]{1,0:T(1,128)}', space=vmem, size = 0x9000, scoped, tag = 'internal scratch']
  #allocation2 [shape = 'f32[2,16,1]{2,1,0:T(8,128)}', space=vmem, size = 0x4000, scoped, tag = 'scratch operand']
  %s0 = inlined_call_operand.hbm [shape: f32[2,16,64], index: 0, kind: input, shape index: {}]
  %s1 = inlined_call_operand.vmem [shape: f32[16,4], index: 1, kind: input, shape index: {}]
  %s2 = inlined_call_operand.vmem [shape: f32[1,4], index: 2, kind: input, shape index: {}]
  %s3 = inlined_call_operand.vmem [shape: f32[4,16], index: 3, kind: input, shape index: {}]
  %s4 = inlined_call_operand.vmem [shape: f32[1,16], index: 4, kind: input, shape index: {}]
  %s5 = inlined_call_operand.hbm [shape: f32[2,16], index: 5, kind: output, shape index: {}]
  %s6 = sld [smem:[#allocation0]]
  $region42: #{tpu_custom_call.1} parent=0
    _
  %s8 = ssub.s32 1, %s6
  %s9 = scalar_select 0, %s8, %s6
  $region1: #{tpu_custom_call.1} parent=0
    #allocation3 [shape = 'u8[16384]{0}', space=vmem, size = 0x4000, scoped, tag = 'input window, operand 0, single buffered']
    #allocation4 [shape = 's32[1]{0}', space=sflag, size = 0x4, scoped, tag = 'scoped memory for tpu_custom_call.1']
    #allocation5 [shape = 's32[1]{0}', space=sflag, size = 0x4, scoped, tag = 'scoped memory for tpu_custom_call.1']
    #allocation6 [shape = 'u8[1024]{0}', space=vmem, size = 0x400, scoped, tag = 'output window, operand 0, single buffered']
    %10 = vsyncpa [#allocation4], 0
    %11 = vsyncpa [#allocation5], 0
    // Predicated region
    $region2: #{tpu_custom_call.1} parent=1 // pred_check
      _
    $region3: #{tpu_custom_call.1} parent=1 // pred_check_branch
      %13 = sbr.rel (0) target = $region5
    $region4: #{tpu_custom_call.1} parent=1 // pred_region
      %15 = vsyncadd [#allocation4], 0
      %s16 = sshll.u32 %s0, 4
      %s17 = int_to_ptr.hbm [resolvable:$true] %s16
      %s18 = sshll.u32 [#allocation3], 4
      %s19 = int_to_ptr.vmem [resolvable:$true] %s18
      %24 = dma.hbm_to_vmem [thread:$0]  %s17, 512, %s19, [#allocation4], 128, 128, 8
    $region5: #{tpu_custom_call.1} parent=1 // pred_fallthru
      _
    // Predicated region
    $region6: #{tpu_custom_call.1} parent=1 // pred_check
      _
    $region7: #{tpu_custom_call.1} parent=1 // pred_check_branch
      %26 = sbr.rel (0) target = $region9
    $region8: #{tpu_custom_call.1} parent=1 // pred_region
      _
    $region9: #{tpu_custom_call.1} parent=1 // pred_fallthru
      _
    // Predicated region
    $region10: #{tpu_custom_call.1} parent=1 // pred_check
      _
    $region11: #{tpu_custom_call.1} parent=1 // pred_check_branch
      %28 = sbr.rel (0) target = $region13
    $region12: #{tpu_custom_call.1} parent=1 // pred_region
      _
    $region13: #{tpu_custom_call.1} parent=1 // pred_fallthru
      _
    // Predicated region
    $region14: #{tpu_custom_call.1} parent=1 // pred_check
      _
    $region15: #{tpu_custom_call.1} parent=1 // pred_check_branch
      %30 = sbr.rel (0) target = $region17
    $region16: #{tpu_custom_call.1} parent=1 // pred_region
      _
    $region17: #{tpu_custom_call.1} parent=1 // pred_fallthru
      _
    // Predicated region
    $region18: #{tpu_custom_call.1} parent=1 // pred_check
      _
    $region19: #{tpu_custom_call.1} parent=1 // pred_check_branch
      %32 = sbr.rel (0) target = $region21
    $region20: #{tpu_custom_call.1} parent=1 // pred_region
      _
    $region21: #{tpu_custom_call.1} parent=1 // pred_fallthru
      _
    // Predicated region
    $region22: #{tpu_custom_call.1} parent=1 // pred_check
      _
    $region23: #{tpu_custom_call.1} parent=1 // pred_check_branch
      %34 = sbr.rel (0) target = $region25
    $region24: #{tpu_custom_call.1} parent=1 // pred_region
      %36 = dma.done [#allocation4], 512
    $region25: #{tpu_custom_call.1} parent=1 // pred_fallthru
      _
    %p37 = scmp.eq.s32.totalorder 0, 0
    // Predicated region
    $region26: #{tpu_custom_call.1} parent=1 // pred_check
      %p38 = pneg %p37
    $region27: #{tpu_custom_call.1} parent=1 // pred_check_branch
      %40 = sbr.rel (%p38) target = $region29
    $region28: #{tpu_custom_call.1} parent=1 // pred_region
      %vm41 = vcmask 7168
      %42 = vst.msk [vmem:[#allocation2] sm:$0xff] %vm41, 0.0
      %43 = vst.msk [vmem:[#allocation2 + $0x8] sm:$0xff] %vm41, 0.0
      %44 = vst.msk [vmem:[#allocation2 + $0x10] sm:$0xff] %vm41, 0.0
      %45 = vst.msk [vmem:[#allocation2 + $0x18] sm:$0xff] %vm41, 0.0
    $region29: #{tpu_custom_call.1} parent=1 // pred_fallthru
      _
    %v46 = vld [vmem:[#allocation3] sm:$0xff]
    %v47 = vld [vmem:[#allocation3 + $0x8] sm:$0xff]
    %v48 = vld [vmem:[#allocation3 + $0x10] sm:$0xff]
    %v49 = vld [vmem:[#allocation3 + $0x18] sm:$0xff]
    %v50 = vld [vmem:[#allocation2] sm:$0xff]
    %v51 = vld [vmem:[#allocation2 + $0x8] sm:$0xff]
    %v52 = vld [vmem:[#allocation2 + $0x10] sm:$0xff]
    %v53 = vld [vmem:[#allocation2 + $0x18] sm:$0xff]
    %vm54 = vcmask 523264
    %v55 = vsel %vm54, %v46, 0.0
    %56 = vadd.xlane.f32.xlu0 %v55
    %v57 = vpop.xlane.xlu0 %56
    %v58 = vsel %vm54, %v47, 0.0
    %59 = vadd.xlane.f32.xlu0 %v58
    %v60 = vpop.xlane.xlu0 %59
    %v61 = vsel %vm54, %v48, 0.0
    %62 = vadd.xlane.f32.xlu0 %v61
    %v63 = vpop.xlane.xlu0 %62
    %v64 = vsel %vm54, %v49, 0.0
    %65 = vadd.xlane.f32.xlu0 %v64
    %v66 = vpop.xlane.xlu0 %65
    %v67 = vadd.f32 %v50, %v57
    %v68 = vadd.f32 %v51, %v60
    %v69 = vadd.f32 %v52, %v63
    %v70 = vadd.f32 %v53, %v66
    %vm71 = vcmask 7168
    %72 = vst.msk [vmem:[#allocation2] sm:$0xff] %vm71, %v67
    %73 = vst.msk [vmem:[#allocation2 + $0x8] sm:$0xff] %vm71, %v68
    %74 = vst.msk [vmem:[#allocation2 + $0x10] sm:$0xff] %vm71, %v69
    %75 = vst.msk [vmem:[#allocation2 + $0x18] sm:$0xff] %vm71, %v70
    // Predicated region
    $region30: #{tpu_custom_call.1} parent=1 // pred_check
      %p76 = pneg %p37
    $region31: #{tpu_custom_call.1} parent=1 // pred_check_branch
      %78 = sbr.rel (%p76) target = $region33
    $region32: #{tpu_custom_call.1} parent=1 // pred_region
      %v79 = vld [vmem:[#allocation2] sm:$0xff]
      %v80 = vld [vmem:[#allocation2 + $0x8] sm:$0xff]
      %v81 = vld [vmem:[#allocation2 + $0x10] sm:$0xff]
      %v82 = vld [vmem:[#allocation2 + $0x18] sm:$0xff]
      %v83 = vadd.f32 %v79, 0.0
      %v84 = vadd.f32 %v80, 0.0
      %v85 = vadd.f32 %v81, 0.0
      %v86 = vadd.f32 %v82, 0.0
      %v87 = vmul.f32 %v83, 0.015625
      %v88 = vmul.f32 %v84, 0.015625
      %v89 = vmul.f32 %v85, 0.015625
      %v90 = vmul.f32 %v86, 0.015625
      %v91 = vld [vmem:[%s1] sm:$0xff]
      %v92 = vld [vmem:[%s1 + $0x8] sm:$0xff]
      %v93 = vld [vmem:[%s2] sm:$0x1]
      %v95 = vperm.slane %v93, 0
      %101 = vset.pattern.permute.xlu0 0
      %102 = vperm.xlu0 %101, %v87
      %v103 = vpop.permute.xlu0 %102
      %104 = vset.pattern.permute.xlu0 0
      %105 = vperm.xlu0 %104, %v88
      %v106 = vpop.permute.xlu0 %105
      %107 = vset.pattern.permute.xlu0 0
      %108 = vperm.xlu0 %107, %v89
      %v109 = vpop.permute.xlu0 %108
      %110 = vset.pattern.permute.xlu0 0
      %111 = vperm.xlu0 %110, %v90
      %v112 = vpop.permute.xlu0 %111
      %v113 = vlaneseq
      %v114 = vand.u32 %v113, 127
      %v115 = vperm.slane %v103, %v114
      %v116 = vadd.s32 %v114, 4294967288
      %v117 = vperm.slane %v106, %v116
      %vm118 = vcmask 130112
      %v119 = vsel %vm118, %v117, %v115
      %v120 = vperm.slane %v109, %v114
      %v121 = vperm.slane %v112, %v116
      %v122 = vsel %vm118, %v121, %v120
      %vm123 = vcmask 1041409
      %v124 = vsel %vm123, %v122, %v119
      %vm125 = vcmask 130048
      %v126 = vsel %vm125, %v124, 0
      %128 = vmatpush.msra.mxu0 0.0
      %129 = vmatpush.msra.mxu0 0.0
      %130 = vmatpush.msra.mxu0 0.0
      %131 = vmatpush.msra.mxu0 0.0
      %132 = vmatpush.msra.mxu0 0.0
      %133 = vmatpush.msra.mxu0 0.0
      %134 = vmatpush.msra.mxu0 0.0
      %135 = vmatpush.msra.mxu0 0.0
      %136 = vmatpush.msra.mxu0 0.0
      %137 = vmatpush.msra.mxu0 0.0
      %138 = vmatpush.msra.mxu0 0.0
      %139 = vmatpush.msra.mxu0 0.0
      %140 = vmatpush.msra.mxu0 0.0
      %141 = vmatpush.msra.mxu0 0.0
      %142 = vmatpush.msra.mxu0 %v92
      %143 = vmatpush.msra.mxu0 %v91
      %144 = vmatmul.f32.gmra.mxu0 %v126
      %v145 = vpop.f32.mrf.mxu0
      %v146 = vadd.f32 %v95, %v145
      %147 = vdwg.mxu0
      %v148 = vmax.f32 %v146, 0.0
      %v149 = vld [vmem:[%s3] sm:$0xf]
      %v150 = vld [vmem:[%s4] sm:$0x1]
      %v152 = vperm.slane %v150, 0
      %vm154 = vcmask 31744
      %v156 = vsel %vm154, %v148, 0
      %vm158 = vcmask 1043456
      %v160 = vsel %vm158, %v149, 0
      %162 = vmatpush.msra.mxu0 0.0
      %163 = vmatpush.msra.mxu0 0.0
      %164 = vmatpush.msra.mxu0 0.0
      %165 = vmatpush.msra.mxu0 0.0
      %166 = vmatpush.msra.mxu0 0.0
      %167 = vmatpush.msra.mxu0 0.0
      %168 = vmatpush.msra.mxu0 0.0
      %169 = vmatpush.msra.mxu0 0.0
      %170 = vmatpush.msra.mxu0 0.0
      %171 = vmatpush.msra.mxu0 0.0
      %172 = vmatpush.msra.mxu0 0.0
      %173 = vmatpush.msra.mxu0 0.0
      %174 = vmatpush.msra.mxu0 0.0
      %175 = vmatpush.msra.mxu0 0.0
      %176 = vmatpush.msra.mxu0 0.0
      %177 = vmatpush.msra.mxu0 %v160
      %178 = vmatmul.f32.gmra.mxu0 %v156
      %v179 = vpop.f32.mrf.mxu0
      %v180 = vadd.f32 %v152, %v179
      %181 = vdwg.mxu0
      %v182 = vxor.u32 %v180, 2147483648
      %v183 = vmul.f32 %v182, 1.442695
      %v184 = vpow.pop %v183
      %v185 = vadd.f32 %v184, 1.0
      %v186 = vrcp.pop %v185
      %v187 = vmul.f32 %v185, %v186
      %v188 = vsub.f32 1.0, %v187
      %v189 = vmul.f32 %v186, %v188
      %v190 = vadd.f32 %v186, %v189
      %vm191 = vweird.f32 %v185
      %vm192 = vweird.f32 %v186
      %vm193 = vmor %vm191, %vm192
      %v194 = vsel %vm193, %v186, %v190
      %v195 = vand.u32 2147483647, %v185
      %vm196 = vcmp.eq.f32.partialorder %v195, 8.507059e+37
      %v197 = vand.u32 %v185, 2147483648
      %v198 = vor.u32 1.1754944e-38, %v197
      %v199 = vsel %vm196, %v198, %v194
      %v200 = vmul.f32 1.0, %v199
      %vm201 = vcmask 123904
      %202 = vst.msk [vmem:[#allocation6] sm:$0x3] %vm201, %v200
    $region33: #{tpu_custom_call.1} parent=1 // pred_fallthru
      _
    // Predicated region
    $region34: #{tpu_custom_call.1} parent=1 // pred_check
      _
    $region35: #{tpu_custom_call.1} parent=1 // pred_check_branch
      %204 = sbr.rel (0) target = $region37
    $region36: #{tpu_custom_call.1} parent=1 // pred_region
      %206 = vsyncadd [#allocation5], 0
      %s208 = sshll.u32 [#allocation6], 4
      %s209 = int_to_ptr.vmem [resolvable:$true] %s208
      %s210 = sshll.u32 %s5, 4
      %s211 = int_to_ptr.hbm [resolvable:$true] %s210
      %213 = dma.vmem_to_hbm [thread:$0]  %s209, 32, %s211, [#allocation5]
    $region37: #{tpu_custom_call.1} parent=1 // pred_fallthru
      _
    // Predicated region
    $region38: #{tpu_custom_call.1} parent=1 // pred_check
      _
    $region39: #{tpu_custom_call.1} parent=1 // pred_check_branch
      %215 = sbr.rel (0) target = $region41
    $region40: #{tpu_custom_call.1} parent=1 // pred_region
      %217 = dma.done [#allocation5], 32
    $region41: #{tpu_custom_call.1} parent=1 // pred_fallthru
      _
    %218 = vsyncpa [#allocation4], 1
    %219 = vsyncpa [#allocation5], 1

</llo_original>
